<compile_context>
chip_gen: v5e
topology: v5e:2x2
jax: 0.10.0
libtpu: 0.0.40
codegen_flags: <defaults>
</compile_context>

<pallas_src>
import functools

import numpy as np
import jax
import jax.numpy as jnp
from jax import lax
from jax.experimental import pallas as pl
from jax.experimental.pallas import tpu as pltpu

# Module hyper-parameters (deterministic "init").
CUTOFF = 0.5
NONZERO_LOSS_CUTOFF = 1.4
BETA_INIT = 1.2           # nn.Parameter(torch.tensor(1.2)) -> deterministic scalar
MARGIN = 0.2
EPS = 1e-8


# ---------------------------------------------------------------------------
# Kernel 1: distance-weighted sampling weights (row-tiled)
# ---------------------------------------------------------------------------
def _dws_weights_kernel(xt_ref, xf_ref, sq_ref, tcol_ref, trow_ref, w_ref,
                        *, valid_cols, feat_dim):
    xt_raw = xt_ref[...]                                   # (TM, C) native dtype
    xf_raw = xf_ref[...]                                   # (Bp, C) native dtype

    # gram tile = x_tile @ x_full^T  (contract feature axis of both; MXU, f32 acc)
    gram = lax.dot_general(xt_raw, xf_raw, (((1,), (1,)), ((), ())),
                           preferred_element_type=jnp.float32)   # (TM, Bp)

    # Elementwise / transcendental math in f32 (bf16-safe on v5e).
    xt = xt_raw.astype(jnp.float32)
    sq_i = jnp.sum(xt * xt, axis=1, keepdims=True)         # (TM, 1) lane reduce
    sq_j = sq_ref[...]                                     # (1, Bp) precomputed

    tm, bp = gram.shape
    row_g = lax.broadcasted_iota(jnp.int32, (tm, bp), 0) + pl.program_id(0) * tm
    col_g = lax.broadcasted_iota(jnp.int32, (tm, bp), 1)

    # Squared distance; +1 on the diagonal (torch adds eye before sqrt), then
    # clamp(dist, min=cutoff) expressed in d^2.  Clamping also kills tiny
    # negative radicands from f32 rounding (NaN-free, unlike raw sqrt).
    d2 = sq_i + sq_j - 2.0 * gram
    d2 = jnp.where(row_g == col_g, d2 + 1.0, d2)
    d2 = jnp.maximum(d2, CUTOFF * CUTOFF)

    # log_weights with log(dist) = 0.5*log(d2) and dist^2 = d2  (no sqrt needed).
    c = jnp.float32(feat_dim)
    log_w = (2.0 - c) * 0.5 * jnp.log(d2) \
            - (c - 3.0) * 0.5 * jnp.log(1.0 - 0.25 * d2)
    # Per-row max: equivalent to the global max after per-row normalization.
    w = jnp.exp(log_w - jnp.max(log_w, axis=1, keepdims=True))

    keep = (tcol_ref[...] != trow_ref[...]) \
           & (d2 < NONZERO_LOSS_CUTOFF * NONZERO_LOSS_CUTOFF) \
           & (col_g < valid_cols)                          # mask padded columns
    w = jnp.where(keep, w, 0.0)
    # Rows whose mask zeroes every weight become NaN after this division, exactly
    # like torch -- the host sampling loop relies on that NaN to trigger its
    # uniform fallback, so do NOT "fix" it.
    w_ref[...] = w / jnp.sum(w, axis=1, keepdims=True)


def dws_weights(embedding, target):
    B, C = embedding.shape
    if B >= 256:
        TM = 256                       # <= 256 rows: fits v7x's smaller VMEM too
    else:
        TM = max(8, int(np.ceil(B / 8) * 8))
    B_pad = int(np.ceil(B / TM) * TM)

    emb_p = jnp.pad(embedding, ((0, B_pad - B), (0, 0)))   # keep native dtype
    tgt_p = jnp.pad(target.astype(jnp.int32), (0, B_pad - B), constant_values=-1)
    tcol = tgt_p.reshape(B_pad, 1)
    trow = tgt_p.reshape(1, B_pad)
    # Squared norms of all rows, precomputed once (avoids per-tile cross-lane work).
    sq = jnp.sum(jnp.square(emb_p.astype(jnp.float32)), axis=1).reshape(1, B_pad)

    kernel = functools.partial(_dws_weights_kernel, valid_cols=B, feat_dim=C)
    w = pl.pallas_call(
        kernel,
        out_shape=jax.ShapeDtypeStruct((B_pad, B_pad), jnp.float32),
        grid=(B_pad // TM,),
        in_specs=[
            pl.BlockSpec((TM, C), lambda i: (i, 0)),       # row tile
            pl.BlockSpec((B_pad, C), lambda i: (0, 0)),    # full embedding (resident)
            pl.BlockSpec((1, B_pad), lambda i: (0, 0)),    # squared norms (row)
            pl.BlockSpec((TM, 1), lambda i: (i, 0)),       # target column tile
            pl.BlockSpec((1, B_pad), lambda i: (0, 0)),    # target row
        ],
        out_specs=pl.BlockSpec((TM, B_pad), lambda i: (i, 0)),
        compiler_params=pltpu.CompilerParams(
            dimension_semantics=("parallel",)),
    )(emb_p, emb_p, sq, tcol, trow)
    return w[:B, :B]


# ---------------------------------------------------------------------------
# Kernel 2: margin loss over sampled (anchor, positive, negative) triples
# ---------------------------------------------------------------------------
def _margin_loss_kernel(nvalid_ref, beta_ref, anc_ref, pos_ref, neg_ref,
                        loss_ref, lsum_ref, csum_ref):
    pid = pl.program_id(0)

    @pl.when(pid == 0)
    def _():
        lsum_ref[...] = jnp.zeros_like(lsum_ref)
        csum_ref[...] = jnp.zeros_like(csum_ref)

    anc = anc_ref[...].astype(jnp.float32)
    pos = pos_ref[...].astype(jnp.float32)
    neg = neg_ref[...].astype(jnp.float32)
    beta = beta_ref[0]

    d_ap = jnp.sqrt(jnp.sum((pos - anc) ** 2, axis=1, keepdims=True) + EPS)  # (TP,1)
    d_an = jnp.sqrt(jnp.sum((neg - anc) ** 2, axis=1, keepdims=True) + EPS)  # (TP,1)

    pos_loss = jnp.maximum(d_ap - beta + MARGIN, 0.0)
    neg_loss = jnp.maximum(beta - d_an + MARGIN, 0.0)

    # Mask padding rows using their global index.
    tp = pos_loss.shape[0]
    g_row = lax.broadcasted_iota(jnp.int32, pos_loss.shape, 0) + pid * tp
    valid = g_row < nvalid_ref[0]
    pos_loss = jnp.where(valid, pos_loss, 0.0)
    neg_loss = jnp.where(valid, neg_loss, 0.0)

    # torch: sum((pos_loss > 0) + (neg_loss > 0))  (bool + bool == logical OR)
    pair = ((pos_loss > 0.0) | (neg_loss > 0.0)).astype(jnp.float32)

    lsum_ref[...] += jnp.sum(pos_loss + neg_loss, axis=0, keepdims=True)
    csum_ref[...] += jnp.sum(pair, axis=0, keepdims=True)

    @pl.when(pid == pl.num_programs(0) - 1)
    def _():
        loss_ref[...] = lsum_ref[...] / jnp.maximum(csum_ref[...], 1.0)


def margin_loss(anchor, negative, positive, beta=BETA_INIT):
    P, C = anchor.shape
    if P >= 256:
        TP = 256
    else:
        TP = max(8, int(np.ceil(P / 8) * 8))
    P_pad = int(np.ceil(P / TP) * TP) if P > 0 else TP

    def pad(a):
        return jnp.pad(a, ((0, P_pad - P), (0, 0)))        # keep native dtype

    nvalid = jnp.array([P], dtype=jnp.int32)
    beta_arr = jnp.array([beta], dtype=jnp.float32)

    smem = pl.BlockSpec(memory_space=pltpu.MemorySpace.SMEM)
    loss = pl.pallas_call(
        _margin_loss_kernel,
        out_shape=jax.ShapeDtypeStruct((1, 1), jnp.float32),
        grid=(P_pad // TP,),
        in_specs=[smem, smem,
                  pl.BlockSpec((TP, C), lambda i: (i, 0)),
                  pl.BlockSpec((TP, C), lambda i: (i, 0)),
                  pl.BlockSpec((TP, C), lambda i: (i, 0))],
        out_specs=pl.BlockSpec((1, 1), lambda i: (0, 0)),
        scratch_shapes=[pltpu.VMEM((1, 1), jnp.float32),   # running loss sum
                        pltpu.VMEM((1, 1), jnp.float32)],  # running pair count
        compiler_params=pltpu.CompilerParams(
            dimension_semantics=("arbitrary",)),
    )(nvalid, beta_arr, pad(anchor), pad(positive), pad(negative))
    return loss[0, 0]


# ---------------------------------------------------------------------------
# Full SampledMarginLoss forward
# ---------------------------------------------------------------------------
def sampled_margin_loss(embedding, target, beta=BETA_INIT, seed=0):
    B, C = embedding.shape
    weights = dws_weights(embedding, target)

    np_weights = np.asarray(jax.device_get(weights))
    target_np = np.asarray(jax.device_get(target))
    # `unequal` rebuilt on host from the tiny target vector (no (B,B) transfer).
    unequal_np = target_np[:, None] != target_np[None, :]

    # TODO(synk): host-side np.random.choice sampling has no Pallas equivalent
    # (data-dependent sizes + numpy RNG); the PyTorch reference also runs this
    # on CPU via .cpu().numpy(), so it stays as seeded numpy glue here.
    np.random.seed(seed)
    a_indices, p_indices, n_indices = [], [], []
    for i in range(B):
        same = (1 - unequal_np[i]).nonzero()[0]
        if np.isnan(np_weights[i].sum()):
            np_weights_ = unequal_np[i].astype(float)
            np_weights_ /= np_weights_.sum()
        else:
            np_weights_ = np_weights[i]
        # float64 renormalization (no change to the distribution; avoids numpy's
        # strict sum-to-1 tolerance rejecting f32-rounded probabilities).
        np_weights_ = np_weights_ / np_weights_.sum()
        try:
            n_indices += np.random.choice(B, len(same) - 1, p=np_weights_,
                                          replace=False).tolist()
        except ValueError:
            n_indices += np.random.choice(B, len(same) - 1, p=np_weights_).tolist()
        for j in same:
            if j != i:
                a_indices.append(i)
                p_indices.append(int(j))

    anchor = embedding[np.array(a_indices, dtype=np.int32)]
    positive = embedding[np.array(p_indices, dtype=np.int32)]
    negative = embedding[np.array(n_indices, dtype=np.int32)]

    return margin_loss(anchor, negative, positive, beta)


if __name__ == "__main__":
    key = jax.random.PRNGKey(0)
    B, C = 8, 32
    emb = jax.random.normal(key, (B, C), dtype=jnp.float32)
    emb = emb / jnp.linalg.norm(emb, axis=1, keepdims=True)   # unit-norm embeddings
    target = jnp.array([0, 0, 1, 1, 2, 2, 3, 3], dtype=jnp.int32)

    loss = sampled_margin_loss(emb, target)
    jax.block_until_ready(loss)
    print("KERNEL_OK")
</pallas_src>

<mosaic_0001>
module attributes {stable_mosaic.version = 11 : i64} {
  func.func @_dws_weights_kernel(%arg0: i32, %arg1: memref<8x32xf32, #tpu.memory_space<vmem>>, %arg2: memref<8x32xf32, #tpu.memory_space<vmem>>, %arg3: memref<1x8xf32, #tpu.memory_space<vmem>>, %arg4: memref<8x1xi32, #tpu.memory_space<vmem>>, %arg5: memref<1x8xi32, #tpu.memory_space<vmem>>, %arg6: memref<8x8xf32, #tpu.memory_space<vmem>>) attributes {dimension_semantics = [#tpu.dimension_semantics<parallel>], iteration_bounds = array<i64: 1>, scalar_prefetch = 0 : i64, scratch_operands = 0 : i64, tpu.core_type = #tpu.core_type<tc>, window_params = [{transform_indices = @transform_0, window_bounds = array<i64: 8, 32>}, {pipeline_mode = #tpu.pipeline_mode<synchronous>, transform_indices = @transform_1, window_bounds = array<i64: 8, 32>}, {pipeline_mode = #tpu.pipeline_mode<synchronous>, transform_indices = @transform_2, window_bounds = array<i64: 1, 8>}, {transform_indices = @transform_3, window_bounds = array<i64: 8, 1>}, {pipeline_mode = #tpu.pipeline_mode<synchronous>, transform_indices = @transform_4, window_bounds = array<i64: 1, 8>}, {transform_indices = @transform_5, window_bounds = array<i64: 8, 8>}]} {
    %c0 = arith.constant 0 : index
    %c0_0 = arith.constant 0 : index
    %0 = vector.load %arg1[%c0, %c0_0] : memref<8x32xf32, #tpu.memory_space<vmem>>, vector<8x32xf32>
    %c0_1 = arith.constant 0 : index
    %c0_2 = arith.constant 0 : index
    %1 = vector.load %arg2[%c0_1, %c0_2] : memref<8x32xf32, #tpu.memory_space<vmem>>, vector<8x32xf32>
    %cst = arith.constant dense<0.000000e+00> : vector<8x8xf32>
    %2 = tpu.matmul %0, %1, %cst {dimension_numbers = #tpu.dot_dimension_numbers<[1], [1], [0], [0], [0, 0, 1, 0], [], []>} : vector<8x32xf32>, vector<8x32xf32>, vector<8x8xf32> -> vector<8x8xf32>
    %3 = arith.mulf %0, %0 : vector<8x32xf32>
    %cst_3 = arith.constant dense<0.000000e+00> : vector<8xf32>
    %4 = vector.multi_reduction <add>, %3, %cst_3 [1] : vector<8x32xf32> to vector<8xf32>
    %5 = vector.shape_cast %4 : vector<8xf32> to vector<8x1xf32>
    %c0_4 = arith.constant 0 : index
    %c0_5 = arith.constant 0 : index
    %6 = vector.load %arg3[%c0_4, %c0_5] : memref<1x8xf32, #tpu.memory_space<vmem>>, vector<1x8xf32>
    %7 = tpu.iota {dimensions = array<i32: 0>} : vector<8x8xi32>
    %c8_i32 = arith.constant 8 : i32
    %8 = arith.muli %arg0, %c8_i32 : i32
    %9 = vector.broadcast %8 : i32 to vector<8x8xi32>
    %10 = arith.addi %7, %9 : vector<8x8xi32>
    %11 = tpu.iota {dimensions = array<i32: 1>} : vector<8x8xi32>
    %12 = vector.broadcast %5 : vector<8x1xf32> to vector<8x8xf32>
    %13 = vector.broadcast %6 : vector<1x8xf32> to vector<8x8xf32>
    %14 = arith.addf %12, %13 : vector<8x8xf32>
    %cst_6 = arith.constant 2.000000e+00 : f32
    %15 = vector.broadcast %cst_6 : f32 to vector<8x8xf32>
    %16 = arith.mulf %15, %2 : vector<8x8xf32>
    %17 = arith.subf %14, %16 : vector<8x8xf32>
    %18 = arith.cmpi eq, %10, %11 : vector<8x8xi32>
    %cst_7 = arith.constant 1.000000e+00 : f32
    %19 = vector.broadcast %cst_7 : f32 to vector<8x8xf32>
    %20 = arith.addf %17, %19 : vector<8x8xf32>
    %21 = arith.select %18, %20, %17 : vector<8x8xi1>, vector<8x8xf32>
    %cst_8 = arith.constant 2.500000e-01 : f32
    %22 = vector.broadcast %cst_8 : f32 to vector<8x8xf32>
    %23 = arith.maximumf %21, %22 : vector<8x8xf32>
    %cst_9 = arith.constant 2.000000e+00 : f32
    %cst_10 = arith.constant 3.200000e+01 : f32
    %24 = arith.subf %cst_9, %cst_10 : f32
    %cst_11 = arith.constant 5.000000e-01 : f32
    %25 = arith.mulf %24, %cst_11 : f32
    %26 = math.log %23 : vector<8x8xf32>
    %27 = vector.broadcast %25 : f32 to vector<8x8xf32>
    %28 = arith.mulf %27, %26 : vector<8x8xf32>
    %cst_12 = arith.constant 3.200000e+01 : f32
    %cst_13 = arith.constant 3.000000e+00 : f32
    %29 = arith.subf %cst_12, %cst_13 : f32
    %cst_14 = arith.constant 5.000000e-01 : f32
    %30 = arith.mulf %29, %cst_14 : f32
    %cst_15 = arith.constant 2.500000e-01 : f32
    %31 = vector.broadcast %cst_15 : f32 to vector<8x8xf32>
    %32 = arith.mulf %31, %23 : vector<8x8xf32>
    %cst_16 = arith.constant 1.000000e+00 : f32
    %33 = vector.broadcast %cst_16 : f32 to vector<8x8xf32>
    %34 = arith.subf %33, %32 : vector<8x8xf32>
    %35 = math.log %34 : vector<8x8xf32>
    %36 = vector.broadcast %30 : f32 to vector<8x8xf32>
    %37 = arith.mulf %36, %35 : vector<8x8xf32>
    %38 = arith.subf %28, %37 : vector<8x8xf32>
    %cst_17 = arith.constant dense<0xFF800000> : vector<8xf32>
    %39 = vector.multi_reduction <maximumf>, %38, %cst_17 [1] : vector<8x8xf32> to vector<8xf32>
    %40 = vector.shape_cast %39 : vector<8xf32> to vector<8x1xf32>
    %41 = vector.broadcast %40 : vector<8x1xf32> to vector<8x8xf32>
    %42 = arith.subf %38, %41 : vector<8x8xf32>
    %43 = math.exp %42 : vector<8x8xf32>
    %c0_18 = arith.constant 0 : index
    %c0_19 = arith.constant 0 : index
    %44 = vector.load %arg4[%c0_18, %c0_19] : memref<8x1xi32, #tpu.memory_space<vmem>>, vector<8x1xi32>
    %c0_20 = arith.constant 0 : index
    %c0_21 = arith.constant 0 : index
    %45 = vector.load %arg5[%c0_20, %c0_21] : memref<1x8xi32, #tpu.memory_space<vmem>>, vector<1x8xi32>
    %46 = vector.broadcast %44 : vector<8x1xi32> to vector<8x8xi32>
    %47 = vector.broadcast %45 : vector<1x8xi32> to vector<8x8xi32>
    %48 = arith.cmpi ne, %46, %47 : vector<8x8xi32>
    %cst_22 = arith.constant 1.960000e+00 : f32
    %49 = vector.broadcast %cst_22 : f32 to vector<8x8xf32>
    %50 = arith.cmpf olt, %23, %49 : vector<8x8xf32>
    %51 = arith.andi %48, %50 : vector<8x8xi1>
    %c8_i32_23 = arith.constant 8 : i32
    %52 = vector.broadcast %c8_i32_23 : i32 to vector<8x8xi32>
    %53 = arith.cmpi slt, %11, %52 : vector<8x8xi32>
    %54 = arith.andi %51, %53 : vector<8x8xi1>
    %cst_24 = arith.constant 0.000000e+00 : f32
    %55 = vector.broadcast %cst_24 : f32 to vector<8x8xf32>
    %56 = arith.select %54, %43, %55 : vector<8x8xi1>, vector<8x8xf32>
    %cst_25 = arith.constant dense<0.000000e+00> : vector<8xf32>
    %57 = vector.multi_reduction <add>, %56, %cst_25 [1] : vector<8x8xf32> to vector<8xf32>
    %58 = vector.shape_cast %57 : vector<8xf32> to vector<8x1xf32>
    %59 = vector.broadcast %58 : vector<8x1xf32> to vector<8x8xf32>
    %60 = arith.divf %56, %59 : vector<8x8xf32>
    %c0_26 = arith.constant 0 : index
    %c0_27 = arith.constant 0 : index
    %61 = vector.load %arg6[%c0_26, %c0_27] : memref<8x8xf32, #tpu.memory_space<vmem>>, vector<8x8xf32>
    tpu.vector_store %arg6[%c0_26, %c0_27], %60 {strides = array<i32>} : memref<8x8xf32, #tpu.memory_space<vmem>>, vector<8x8xf32>,
    return
  }
  func.func @transform_0(%arg0: i32) -> (i32, i32) {
    %c0_i32 = arith.constant 0 : i32
    %c0_i32_0 = arith.constant 0 : i32
    return %arg0, %c0_i32 : i32, i32
  }
  func.func @transform_1(%arg0: i32) -> (i32, i32) {
    %c0_i32 = arith.constant 0 : i32
    %c0_i32_0 = arith.constant 0 : i32
    %c0_i32_1 = arith.constant 0 : i32
    return %c0_i32, %c0_i32_0 : i32, i32
  }
  func.func @transform_2(%arg0: i32) -> (i32, i32) {
    %c0_i32 = arith.constant 0 : i32
    %c0_i32_0 = arith.constant 0 : i32
    %c0_i32_1 = arith.constant 0 : i32
    return %c0_i32, %c0_i32_0 : i32, i32
  }
  func.func @transform_3(%arg0: i32) -> (i32, i32) {
    %c0_i32 = arith.constant 0 : i32
    %c0_i32_0 = arith.constant 0 : i32
    return %arg0, %c0_i32 : i32, i32
  }
  func.func @transform_4(%arg0: i32) -> (i32, i32) {
    %c0_i32 = arith.constant 0 : i32
    %c0_i32_0 = arith.constant 0 : i32
    %c0_i32_1 = arith.constant 0 : i32
    return %c0_i32, %c0_i32_0 : i32, i32
  }
  func.func @transform_5(%arg0: i32) -> (i32, i32) {
    %c0_i32 = arith.constant 0 : i32
    %c0_i32_0 = arith.constant 0 : i32
    return %arg0, %c0_i32 : i32, i32
  }
}

</mosaic_0001>

<llo_original>
// kernel: tpu_custom_call.1
$region0: #{tpu_custom_call.1}
  #allocation0 [shape = 'u32[]', space=smem, size = 0x4, offset = 0x4, fixed_abs, tag = 'smem constant byte address 0x4 - core index']
  #allocation1 [shape = 'u32[72,128]{1,0:T(1,128)}', space=vmem, size = 0x9000, scoped, tag = 'internal scratch']
  %s0 = inlined_call_operand.vmem [shape: f32[8,32], index: 0, kind: input, shape index: {}]
  %s1 = inlined_call_operand.hbm [shape: f32[8,32], index: 1, kind: input, shape index: {}]
  %s2 = inlined_call_operand.vmem [shape: f32[1,8], index: 2, kind: input, shape index: {}]
  %s3 = inlined_call_operand.vmem [shape: s32[8,1], index: 3, kind: input, shape index: {}]
  %s4 = inlined_call_operand.vmem [shape: s32[1,8], index: 4, kind: input, shape index: {}]
  %s5 = inlined_call_operand.hbm [shape: f32[8,8], index: 5, kind: output, shape index: {}]
  %s6 = sld [smem:[#allocation0]]
  $region34: #{tpu_custom_call.1} parent=0
    _
  %s8 = ssub.s32 1, %s6
  %s9 = scalar_select 0, %s8, %s6
  $region1: #{tpu_custom_call.1} parent=0
    #allocation2 [shape = 'u8[4096]{0}', space=vmem, size = 0x1000, scoped, tag = 'input window, operand 1, single buffered']
    #allocation3 [shape = 's32[1]{0}', space=sflag, size = 0x4, scoped, tag = 'scoped memory for tpu_custom_call.1']
    #allocation4 [shape = 's32[1]{0}', space=sflag, size = 0x4, scoped, tag = 'scoped memory for tpu_custom_call.1']
    #allocation5 [shape = 'u8[4096]{0}', space=vmem, size = 0x1000, scoped, tag = 'output window, operand 0, single buffered']
    %10 = vsyncpa [#allocation3], 0
    %11 = vsyncpa [#allocation4], 0
    // Predicated region
    $region2: #{tpu_custom_call.1} parent=1 // pred_check
      _
    $region3: #{tpu_custom_call.1} parent=1 // pred_check_branch
      %13 = sbr.rel (0) target = $region5
    $region4: #{tpu_custom_call.1} parent=1 // pred_region
      _
    $region5: #{tpu_custom_call.1} parent=1 // pred_fallthru
      _
    // Predicated region
    $region6: #{tpu_custom_call.1} parent=1 // pred_check
      _
    $region7: #{tpu_custom_call.1} parent=1 // pred_check_branch
      %15 = sbr.rel (0) target = $region9
    $region8: #{tpu_custom_call.1} parent=1 // pred_region
      %17 = vsyncadd [#allocation3], 0
      %s19 = sshll.u32 %s1, 4
      %s20 = int_to_ptr.hbm [resolvable:$true] %s19
      %s21 = sshll.u32 [#allocation2], 4
      %s22 = int_to_ptr.vmem [resolvable:$true] %s21
      %24 = dma.hbm_to_vmem [thread:$0]  %s20, 128, %s22, [#allocation3]
    $region9: #{tpu_custom_call.1} parent=1 // pred_fallthru
      _
    // Predicated region
    $region10: #{tpu_custom_call.1} parent=1 // pred_check
      _
    $region11: #{tpu_custom_call.1} parent=1 // pred_check_branch
      %26 = sbr.rel (0) target = $region13
    $region12: #{tpu_custom_call.1} parent=1 // pred_region
      _
    $region13: #{tpu_custom_call.1} parent=1 // pred_fallthru
      _
    // Predicated region
    $region14: #{tpu_custom_call.1} parent=1 // pred_check
      _
    $region15: #{tpu_custom_call.1} parent=1 // pred_check_branch
      %28 = sbr.rel (0) target = $region17
    $region16: #{tpu_custom_call.1} parent=1 // pred_region
      _
    $region17: #{tpu_custom_call.1} parent=1 // pred_fallthru
      _
    // Predicated region
    $region18: #{tpu_custom_call.1} parent=1 // pred_check
      _
    $region19: #{tpu_custom_call.1} parent=1 // pred_check_branch
      %30 = sbr.rel (0) target = $region21
    $region20: #{tpu_custom_call.1} parent=1 // pred_region
      _
    $region21: #{tpu_custom_call.1} parent=1 // pred_fallthru
      _
    // Predicated region
    $region22: #{tpu_custom_call.1} parent=1 // pred_check
      _
    $region23: #{tpu_custom_call.1} parent=1 // pred_check_branch
      %32 = sbr.rel (0) target = $region25
    $region24: #{tpu_custom_call.1} parent=1 // pred_region
      %34 = dma.done [#allocation3], 128
    $region25: #{tpu_custom_call.1} parent=1 // pred_fallthru
      _
    %v35 = vld [vmem:[%s0] sm:$0xff]
    %v36 = vld [vmem:[#allocation2] sm:$0xff]
    %vm37 = vcmask 261120
    %v39 = vsel %vm37, %v35, 0
    %v42 = vsel %vm37, %v36, 0
    %44 = vmatpush.xpose.msra.mxu0 0.0
    %45 = vmatpush.xpose.msra.mxu0 0.0
    %46 = vmatpush.xpose.msra.mxu0 0.0
    %47 = vmatpush.xpose.msra.mxu0 0.0
    %48 = vmatpush.xpose.msra.mxu0 0.0
    %49 = vmatpush.xpose.msra.mxu0 0.0
    %50 = vmatpush.xpose.msra.mxu0 0.0
    %51 = vmatpush.xpose.msra.mxu0 0.0
    %52 = vmatpush.xpose.msra.mxu0 0.0
    %53 = vmatpush.xpose.msra.mxu0 0.0
    %54 = vmatpush.xpose.msra.mxu0 0.0
    %55 = vmatpush.xpose.msra.mxu0 0.0
    %56 = vmatpush.xpose.msra.mxu0 0.0
    %57 = vmatpush.xpose.msra.mxu0 0.0
    %58 = vmatpush.xpose.msra.mxu0 0.0
    %59 = vmatpush.xpose.msra.mxu0 %v42
    %60 = vmatmul.f32.gmra.mxu0 %v39
    %v61 = vpop.f32.mrf.mxu0
    %v62 = vadd.f32 0.0, %v61
    %63 = vdwg.mxu0
    %v64 = vmul.f32 %v35, %v35
    %v65 = vsel %vm37, %v64, 0.0
    %66 = vadd.xlane.f32.xlu0 %v65
    %v67 = vpop.xlane.xlu0 %66
    %v68 = vld [vmem:[%s2] sm:$0x1]
    %v69 = vlaneseq
    %v70 = vshrl.u32 %v69, 7
    %s71 = smul.u32 0, 8
    %v72 = vstv %s71
    %v73 = vadd.s32 %v70, %v72
    %v74 = vlaneseq
    %v75 = vand.u32 %v74, 127
    %v77 = vperm.slane %v68, 0
    %v79 = vadd.f32 %v67, %v77
    %v80 = vmul.f32 %v62, 2.0
    %v81 = vsub.f32 %v79, %v80
    %vm82 = vcmp.eq.s32.totalorder %v73, %v75
    %v83 = vadd.f32 %v81, 1.0
    %v84 = vsel %vm82, %v83, %v81
    %v85 = vmax.f32 %v84, 0.25
    %v86 = vlog2.pop %v85
    %v87 = vmul.f32 %v86, 0.6931472
    %v88 = vmul.f32 %v87, -15.0
    %v89 = vmul.f32 %v85, 0.25
    %v90 = vsub.f32 1.0, %v89
    %v91 = vlog2.pop %v90
    %v92 = vmul.f32 %v91, 0.6931472
    %v93 = vmul.f32 %v92, 14.5
    %v94 = vsub.f32 %v88, %v93
    %vm95 = vcmask 64512
    %v96 = vsel %vm95, %v94, -inf
    %97 = vmax.xlane.f32.xlu0 %v96
    %v98 = vpop.xlane.xlu0 %97
    %v99 = vsub.f32 %v94, %v98
    %v100 = vmul.f32 %v99, 1.442695
    %v101 = vpow.pop %v100
    %v102 = vld [vmem:[%s3] sm:$0xff]
    %v103 = vld [vmem:[%s4] sm:$0x1]
    %104 = vset.pattern.permute.xlu0 0
    %105 = vperm.xlu0 %104, %v102
    %v106 = vpop.permute.xlu0 %105
    %v107 = vperm.slane %v103, 0
    %vm108 = vcmp.ne.s32.totalorder %v106, %v107
    %vm109 = vcmp.lt.f32.partialorder %v85, 1.96
    %vm110 = vmand %vm108, %vm109
    %vm111 = vcmp.lt.s32.totalorder %v75, 8
    %vm112 = vmand %vm110, %vm111
    %v113 = vsel %vm112, %v101, 0.0
    %v114 = vsel %vm95, %v113, 0.0
    %115 = vadd.xlane.f32.xlu0 %v114
    %v116 = vpop.xlane.xlu0 %115
    %v117 = vrcp.pop %v116
    %v118 = vmul.f32 %v116, %v117
    %v119 = vsub.f32 1.0, %v118
    %v120 = vmul.f32 %v117, %v119
    %v121 = vadd.f32 %v117, %v120
    %vm122 = vweird.f32 %v116
    %vm123 = vweird.f32 %v117
    %vm124 = vmor %vm122, %vm123
    %v125 = vsel %vm124, %v117, %v121
    %v126 = vand.u32 2147483647, %v116
    %vm127 = vcmp.eq.f32.partialorder %v126, 8.507059e+37
    %v128 = vand.u32 %v116, 2147483648
    %v129 = vor.u32 1.1754944e-38, %v128
    %v130 = vsel %vm127, %v129, %v125
    %v131 = vmul.f32 %v113, %v130
    %132 = vst.msk [vmem:[#allocation5] sm:$0xff] %vm95, %v131
    // Predicated region
    $region26: #{tpu_custom_call.1} parent=1 // pred_check
      _
    $region27: #{tpu_custom_call.1} parent=1 // pred_check_branch
      %134 = sbr.rel (0) target = $region29
    $region28: #{tpu_custom_call.1} parent=1 // pred_region
      %136 = vsyncadd [#allocation4], 0
      %s138 = sshll.u32 [#allocation5], 4
      %s139 = int_to_ptr.vmem [resolvable:$true] %s138
      %s140 = sshll.u32 %s5, 4
      %s141 = int_to_ptr.hbm [resolvable:$true] %s140
      %143 = dma.vmem_to_hbm [thread:$0]  %s139, 128, %s141, [#allocation4]
    $region29: #{tpu_custom_call.1} parent=1 // pred_fallthru
      _
    // Predicated region
    $region30: #{tpu_custom_call.1} parent=1 // pred_check
      _
    $region31: #{tpu_custom_call.1} parent=1 // pred_check_branch
      %145 = sbr.rel (0) target = $region33
    $region32: #{tpu_custom_call.1} parent=1 // pred_region
      %147 = dma.done [#allocation4], 128
    $region33: #{tpu_custom_call.1} parent=1 // pred_fallthru
      _
    %148 = vsyncpa [#allocation3], 1
    %149 = vsyncpa [#allocation4], 1

</llo_original>
